<compile_context>
chip_gen: v6e
topology: v6e:2x2x1
jax: 0.10.0
libtpu: 0.0.40
codegen_flags: <defaults>
</compile_context>

<pallas_src>
import math

import jax
import jax.numpy as jnp
import numpy as np
from jax import lax
from jax.experimental import pallas as pl
from jax.experimental.pallas import tpu as pltpu

KH = 8    # spatial conv kernel height (over S)
KT1 = 3   # first temporal conv kernel width (over T)
KT2 = 5   # second temporal conv kernel width (over T)
C1 = 64   # spatial conv output channels
C2 = 128  # temporal conv output channels


def cnn_encoder_kernel(x_ref, wband_ref, w1c_ref, w2c_ref,
                       sc1_ref, sh1_ref, sc2_ref, sh2_ref, sc3_ref, sh3_ref,
                       o_ref):
    # x_ref: (1, T, S); o_ref: (1, S_out, T2, C2)
    T = x_ref.shape[1]
    S_out = o_ref.shape[1]
    T2 = o_ref.shape[2]
    T1 = T - KT1 + 1

    # ---- spatial block: Conv2d(1->64,(8,1)) + BN + ReLU --------------------
    # One block-banded matmul produces every S-window at once:
    #   h1[t, s*C1 + c] = sum_kh x[t, s+kh] * ws[kh, c]
    x = x_ref[0]                                               # (T, S) f32
    h1 = jnp.dot(x, wband_ref[...],
                 preferred_element_type=jnp.float32)           # (T, S_out*C1)
    h1 = jnp.maximum(h1 * sc1_ref[...] + sh1_ref[...], 0.0)    # f32 on VPU

    # Re-layout to s-major so all S_out windows batch into the matmul M rows.
    if S_out == 1:
        h1_sm = h1.reshape(1, T, C1)
    else:
        h1_sm = jnp.stack(
            [h1[:, s * C1:(s + 1) * C1] for s in range(S_out)], axis=0)

    # ---- temporal block 1: Conv2d(64->128,(1,3)) + BN + ReLU ---------------
    # K-concatenate the KT1 taps -> single (S_out*T1, 192) @ (192, 128) matmul.
    h1c = jnp.concatenate([h1_sm[:, k:k + T1, :] for k in range(KT1)], axis=-1)
    h1c = h1c.reshape(S_out * T1, KT1 * C1)
    h2 = jnp.dot(h1c, w1c_ref[...], preferred_element_type=jnp.float32)
    h2 = jnp.maximum(h2 * sc2_ref[...] + sh2_ref[...], 0.0)
    h2 = h2.reshape(S_out, T1, C2)

    # ---- temporal block 2: Conv2d(128->128,(1,5)) + BN + ReLU --------------
    # K-concatenate the KT2 taps -> single (S_out*T2, 640) @ (640, 128) matmul.
    h2c = jnp.concatenate([h2[:, k:k + T2, :] for k in range(KT2)], axis=-1)
    h2c = h2c.reshape(S_out * T2, KT2 * C2)
    h3 = jnp.dot(h2c, w2c_ref[...], preferred_element_type=jnp.float32)
    h3 = jnp.maximum(h3 * sc3_ref[...] + sh3_ref[...], 0.0)

    # TODO(synk): nn.Dropout(p=0.5) is identity in eval mode; training-mode
    # random masking (pltpu.prng_seed / prng_random_bits) is not implemented.
    o_ref[0] = h3.reshape(S_out, T2, C2).astype(o_ref.dtype)


def cnn_encoder(x, wband, w1c, w2c, sc1b, sh1b, sc2, sh2, sc3, sh3):
    B, T, S = x.shape
    S_out = S - KH + 1
    T2 = T - (KT1 - 1) - (KT2 - 1)

    params = (wband, w1c, w2c, sc1b, sh1b, sc2, sh2, sc3, sh3)
    param_specs = [pl.BlockSpec(p.shape, lambda b: (0, 0)) for p in params]

    # NOTE: for very large S_out/T on v7x, add a second (parallel) grid axis
    # over S_out tiles to shrink the per-step output block and feed both TCs.
    return pl.pallas_call(
        cnn_encoder_kernel,
        out_shape=jax.ShapeDtypeStruct((B, S_out, T2, C2), jnp.float32),
        grid_spec=pltpu.PrefetchScalarGridSpec(
            num_scalar_prefetch=0,
            grid=(B,),
            in_specs=[pl.BlockSpec((1, T, S), lambda b: (b, 0, 0))] + param_specs,
            out_specs=pl.BlockSpec((1, S_out, T2, C2), lambda b: (b, 0, 0, 0)),
        ),
        compiler_params=pltpu.CompilerParams(
            dimension_semantics=("parallel",),
            vmem_limit_bytes=48 * 1024 * 1024,
        ),
    )(x, *params)


# ------------------------- wrapper-side parameter prep ----------------------
def build_spatial_band(ws, S):
    """Block-banded spatial conv weights: W_band[s+kh, s*C1+c] = ws[kh, c]."""
    S_out = S - KH + 1
    wb = jnp.zeros((S, S_out * C1), jnp.float32)
    for s in range(S_out):
        wb = wb.at[s:s + KH, s * C1:(s + 1) * C1].set(ws)
    return wb


def fold_bn(gamma, beta, mean, var, conv_bias, eps=1e-5):
    s = gamma / jnp.sqrt(var + eps)
    return s.reshape(1, -1), ((conv_bias - mean) * s + beta).reshape(1, -1)


# ----------------------------- reference (plain JAX, NCHW like PyTorch) -----
def reference(x, Ws4, bs, bn1, W1_4, b1, bn2, W2_4, b2, bn3, eps=1e-5):
    dn = ("NCHW", "OIHW", "NCHW")
    prec = lax.Precision.HIGHEST  # keep the reference in full f32 precision

    def bn_relu(y, params):
        g, be, m, v = params
        y = (y - m[None, :, None, None]) / jnp.sqrt(v[None, :, None, None] + eps)
        y = y * g[None, :, None, None] + be[None, :, None, None]
        return jnp.maximum(y, 0.0)

    xn = jnp.transpose(x[:, None, :, :], (0, 1, 3, 2))            # (B,1,S,T)
    y = lax.conv_general_dilated(xn, Ws4, (1, 1), "VALID",
                                 dimension_numbers=dn, precision=prec)
    y = bn_relu(y + bs[None, :, None, None], bn1)
    y = lax.conv_general_dilated(y, W1_4, (1, 1), "VALID",
                                 dimension_numbers=dn, precision=prec)
    y = bn_relu(y + b1[None, :, None, None], bn2)
    y = lax.conv_general_dilated(y, W2_4, (1, 1), "VALID",
                                 dimension_numbers=dn, precision=prec)
    y = bn_relu(y + b2[None, :, None, None], bn3)
    return y                                                       # (B,C2,S_out,T2)


if __name__ == "__main__":
    B, T, S = 2, 16, 8   # batch, time steps, NIRS channels (S == spatial kernel height)

    key = jax.random.PRNGKey(0)
    ks = jax.random.split(key, 8)

    x = jax.random.normal(ks[0], (B, T, S), jnp.float32)

    # Conv weights (PyTorch OIHW shapes), deterministic synthetic init.
    Ws4 = jax.random.normal(ks[1], (C1, 1, KH, 1), jnp.float32) / math.sqrt(KH)
    bs = 0.1 * jax.random.normal(ks[2], (C1,), jnp.float32)
    W1_4 = jax.random.normal(ks[3], (C2, C1, 1, KT1), jnp.float32) / math.sqrt(C1 * KT1)
    b1 = 0.1 * jax.random.normal(ks[4], (C2,), jnp.float32)
    W2_4 = jax.random.normal(ks[5], (C2, C2, 1, KT2), jnp.float32) / math.sqrt(C2 * KT2)
    b2 = 0.1 * jax.random.normal(ks[6], (C2,), jnp.float32)

    # BatchNorm (eval-mode) params, deterministic and non-trivial.
    def bn_params(c, off):
        i = jnp.arange(c, dtype=jnp.float32)
        gamma = 1.0 + 0.01 * i
        beta = 0.02 * i - 0.1 * off
        mean = 0.03 * jnp.sin(i + off)
        var = 1.0 + 0.05 * jnp.cos(i + off) ** 2
        return gamma, beta, mean, var

    bn1 = bn_params(C1, 1.0)
    bn2 = bn_params(C2, 2.0)
    bn3 = bn_params(C2, 3.0)

    # Kernel-side parameter layouts (glue / setup in plain JAX).
    ws = Ws4[:, 0, :, 0].T                               # (KH, C1)
    w1 = jnp.transpose(W1_4[:, :, 0, :], (2, 1, 0))      # (KT1, C1, C2)
    w2 = jnp.transpose(W2_4[:, :, 0, :], (2, 1, 0))      # (KT2, C2, C2)
    sc1, sh1 = fold_bn(*bn1, bs)
    sc2, sh2 = fold_bn(*bn2, b1)
    sc3, sh3 = fold_bn(*bn3, b2)

    S_out = S - KH + 1
    wband = build_spatial_band(ws, S)                           # (S, S_out*C1) f32
    w1c = w1.reshape(KT1 * C1, C2).astype(jnp.float32)          # (192, 128)
    w2c = w2.reshape(KT2 * C2, C2).astype(jnp.float32)          # (640, 128)
    sc1b = jnp.tile(sc1, (1, S_out))                            # (1, S_out*C1)
    sh1b = jnp.tile(sh1, (1, S_out))

    out = cnn_encoder(x, wband, w1c, w2c, sc1b, sh1b, sc2, sh2, sc3, sh3)
    out = jax.block_until_ready(out)                     # (B, S_out, T2, C2)

    ref = reference(x, Ws4, bs, bn1, W1_4, b1, bn2, W2_4, b2, bn3)
    ref_nhwc = jnp.transpose(ref, (0, 2, 3, 1))          # (B, S_out, T2, C2)

    # f32 matmul operands with f32 accumulation -> tight tolerance.
    np.testing.assert_allclose(np.asarray(out), np.asarray(ref_nhwc),
                               rtol=1e-2, atol=1e-2)
    print("KERNEL_OK")
</pallas_src>

<mosaic_0001>
module attributes {stable_mosaic.version = 11 : i64} {
  func.func @cnn_encoder_kernel(%arg0: i32, %arg1: memref<1x16x8xf32, #tpu.memory_space<vmem>>, %arg2: memref<8x64xf32, #tpu.memory_space<vmem>>, %arg3: memref<192x128xf32, #tpu.memory_space<vmem>>, %arg4: memref<640x128xf32, #tpu.memory_space<vmem>>, %arg5: memref<1x64xf32, #tpu.memory_space<vmem>>, %arg6: memref<1x64xf32, #tpu.memory_space<vmem>>, %arg7: memref<1x128xf32, #tpu.memory_space<vmem>>, %arg8: memref<1x128xf32, #tpu.memory_space<vmem>>, %arg9: memref<1x128xf32, #tpu.memory_space<vmem>>, %arg10: memref<1x128xf32, #tpu.memory_space<vmem>>, %arg11: memref<1x1x10x128xf32, #tpu.memory_space<vmem>>) attributes {dimension_semantics = [#tpu.dimension_semantics<parallel>], iteration_bounds = array<i64: 2>, scalar_prefetch = 0 : i64, scratch_operands = 0 : i64, tpu.core_type = #tpu.core_type<tc>, window_params = [{transform_indices = @transform_0, window_bounds = array<i64: 1, 16, 8>}, {pipeline_mode = #tpu.pipeline_mode<synchronous>, transform_indices = @transform_1, window_bounds = array<i64: 8, 64>}, {pipeline_mode = #tpu.pipeline_mode<synchronous>, transform_indices = @transform_2, window_bounds = array<i64: 192, 128>}, {pipeline_mode = #tpu.pipeline_mode<synchronous>, transform_indices = @transform_3, window_bounds = array<i64: 640, 128>}, {pipeline_mode = #tpu.pipeline_mode<synchronous>, transform_indices = @transform_4, window_bounds = array<i64: 1, 64>}, {pipeline_mode = #tpu.pipeline_mode<synchronous>, transform_indices = @transform_5, window_bounds = array<i64: 1, 64>}, {pipeline_mode = #tpu.pipeline_mode<synchronous>, transform_indices = @transform_6, window_bounds = array<i64: 1, 128>}, {pipeline_mode = #tpu.pipeline_mode<synchronous>, transform_indices = @transform_7, window_bounds = array<i64: 1, 128>}, {pipeline_mode = #tpu.pipeline_mode<synchronous>, transform_indices = @transform_8, window_bounds = array<i64: 1, 128>}, {pipeline_mode = #tpu.pipeline_mode<synchronous>, transform_indices = @transform_9, window_bounds = array<i64: 1, 128>}, {transform_indices = @transform_10, window_bounds = array<i64: 1, 1, 10, 128>}]} {
    %c0 = arith.constant 0 : index
    %c0_0 = arith.constant 0 : index
    %c0_1 = arith.constant 0 : index
    %0 = vector.load %arg1[%c0, %c0_0, %c0_1] : memref<1x16x8xf32, #tpu.memory_space<vmem>>, vector<1x16x8xf32>
    %1 = vector.shape_cast %0 : vector<1x16x8xf32> to vector<16x8xf32>
    %c0_2 = arith.constant 0 : index
    %c0_3 = arith.constant 0 : index
    %2 = vector.load %arg2[%c0_2, %c0_3] : memref<8x64xf32, #tpu.memory_space<vmem>>, vector<8x64xf32>
    %cst = arith.constant dense<0.000000e+00> : vector<16x64xf32>
    %3 = tpu.matmul %1, %2, %cst {dimension_numbers = #tpu.dot_dimension_numbers<[1], [0], [0], [1], [0, 0, 1, 1], [], []>} : vector<16x8xf32>, vector<8x64xf32>, vector<16x64xf32> -> vector<16x64xf32>
    %c0_4 = arith.constant 0 : index
    %c0_5 = arith.constant 0 : index
    %4 = vector.load %arg5[%c0_4, %c0_5] : memref<1x64xf32, #tpu.memory_space<vmem>>, vector<1x64xf32>
    %5 = vector.broadcast %4 : vector<1x64xf32> to vector<16x64xf32>
    %6 = arith.mulf %3, %5 : vector<16x64xf32>
    %c0_6 = arith.constant 0 : index
    %c0_7 = arith.constant 0 : index
    %7 = vector.load %arg6[%c0_6, %c0_7] : memref<1x64xf32, #tpu.memory_space<vmem>>, vector<1x64xf32>
    %8 = vector.broadcast %7 : vector<1x64xf32> to vector<16x64xf32>
    %9 = arith.addf %6, %8 : vector<16x64xf32>
    %cst_8 = arith.constant 0.000000e+00 : f32
    %10 = vector.broadcast %cst_8 : f32 to vector<16x64xf32>
    %11 = arith.maximumf %9, %10 : vector<16x64xf32>
    %12 = vector.shape_cast %11 : vector<16x64xf32> to vector<1x16x64xf32>
    %13 = vector.extract_strided_slice %12 {offsets = [0, 0, 0], sizes = [1, 14, 64], strides = [1, 1, 1]} : vector<1x16x64xf32> to vector<1x14x64xf32>
    %14 = vector.extract_strided_slice %12 {offsets = [0, 1, 0], sizes = [1, 14, 64], strides = [1, 1, 1]} : vector<1x16x64xf32> to vector<1x14x64xf32>
    %15 = vector.extract_strided_slice %12 {offsets = [0, 2, 0], sizes = [1, 14, 64], strides = [1, 1, 1]} : vector<1x16x64xf32> to vector<1x14x64xf32>
    %16 = tpu.concatenate %13, %14, %15 in 2 : vector<1x14x64xf32>, vector<1x14x64xf32>, vector<1x14x64xf32> -> vector<1x14x192xf32>
    %17 = vector.shape_cast %16 : vector<1x14x192xf32> to vector<14x192xf32>
    %c0_9 = arith.constant 0 : index
    %c0_10 = arith.constant 0 : index
    %18 = vector.load %arg3[%c0_9, %c0_10] : memref<192x128xf32, #tpu.memory_space<vmem>>, vector<192x128xf32>
    %cst_11 = arith.constant dense<0.000000e+00> : vector<14x128xf32>
    %19 = tpu.matmul %17, %18, %cst_11 {dimension_numbers = #tpu.dot_dimension_numbers<[1], [0], [0], [1], [0, 0, 1, 1], [], []>} : vector<14x192xf32>, vector<192x128xf32>, vector<14x128xf32> -> vector<14x128xf32>
    %c0_12 = arith.constant 0 : index
    %c0_13 = arith.constant 0 : index
    %20 = vector.load %arg7[%c0_12, %c0_13] : memref<1x128xf32, #tpu.memory_space<vmem>>, vector<1x128xf32>
    %21 = vector.broadcast %20 : vector<1x128xf32> to vector<14x128xf32>
    %22 = arith.mulf %19, %21 : vector<14x128xf32>
    %c0_14 = arith.constant 0 : index
    %c0_15 = arith.constant 0 : index
    %23 = vector.load %arg8[%c0_14, %c0_15] : memref<1x128xf32, #tpu.memory_space<vmem>>, vector<1x128xf32>
    %24 = vector.broadcast %23 : vector<1x128xf32> to vector<14x128xf32>
    %25 = arith.addf %22, %24 : vector<14x128xf32>
    %cst_16 = arith.constant 0.000000e+00 : f32
    %26 = vector.broadcast %cst_16 : f32 to vector<14x128xf32>
    %27 = arith.maximumf %25, %26 : vector<14x128xf32>
    %28 = vector.shape_cast %27 : vector<14x128xf32> to vector<1x14x128xf32>
    %29 = vector.extract_strided_slice %28 {offsets = [0, 0, 0], sizes = [1, 10, 128], strides = [1, 1, 1]} : vector<1x14x128xf32> to vector<1x10x128xf32>
    %30 = vector.extract_strided_slice %28 {offsets = [0, 1, 0], sizes = [1, 10, 128], strides = [1, 1, 1]} : vector<1x14x128xf32> to vector<1x10x128xf32>
    %31 = vector.extract_strided_slice %28 {offsets = [0, 2, 0], sizes = [1, 10, 128], strides = [1, 1, 1]} : vector<1x14x128xf32> to vector<1x10x128xf32>
    %32 = vector.extract_strided_slice %28 {offsets = [0, 3, 0], sizes = [1, 10, 128], strides = [1, 1, 1]} : vector<1x14x128xf32> to vector<1x10x128xf32>
    %33 = vector.extract_strided_slice %28 {offsets = [0, 4, 0], sizes = [1, 10, 128], strides = [1, 1, 1]} : vector<1x14x128xf32> to vector<1x10x128xf32>
    %34 = tpu.concatenate %29, %30, %31, %32, %33 in 2 : vector<1x10x128xf32>, vector<1x10x128xf32>, vector<1x10x128xf32>, vector<1x10x128xf32>, vector<1x10x128xf32> -> vector<1x10x640xf32>
    %35 = vector.shape_cast %34 : vector<1x10x640xf32> to vector<10x640xf32>
    %c0_17 = arith.constant 0 : index
    %c0_18 = arith.constant 0 : index
    %36 = vector.load %arg4[%c0_17, %c0_18] : memref<640x128xf32, #tpu.memory_space<vmem>>, vector<640x128xf32>
    %cst_19 = arith.constant dense<0.000000e+00> : vector<10x128xf32>
    %37 = tpu.matmul %35, %36, %cst_19 {dimension_numbers = #tpu.dot_dimension_numbers<[1], [0], [0], [1], [0, 0, 1, 1], [], []>} : vector<10x640xf32>, vector<640x128xf32>, vector<10x128xf32> -> vector<10x128xf32>
    %c0_20 = arith.constant 0 : index
    %c0_21 = arith.constant 0 : index
    %38 = vector.load %arg9[%c0_20, %c0_21] : memref<1x128xf32, #tpu.memory_space<vmem>>, vector<1x128xf32>
    %39 = vector.broadcast %38 : vector<1x128xf32> to vector<10x128xf32>
    %40 = arith.mulf %37, %39 : vector<10x128xf32>
    %c0_22 = arith.constant 0 : index
    %c0_23 = arith.constant 0 : index
    %41 = vector.load %arg10[%c0_22, %c0_23] : memref<1x128xf32, #tpu.memory_space<vmem>>, vector<1x128xf32>
    %42 = vector.broadcast %41 : vector<1x128xf32> to vector<10x128xf32>
    %43 = arith.addf %40, %42 : vector<10x128xf32>
    %cst_24 = arith.constant 0.000000e+00 : f32
    %44 = vector.broadcast %cst_24 : f32 to vector<10x128xf32>
    %45 = arith.maximumf %43, %44 : vector<10x128xf32>
    %46 = vector.shape_cast %45 : vector<10x128xf32> to vector<1x10x128xf32>
    %c0_25 = arith.constant 0 : index
    %c0_26 = arith.constant 0 : index
    %c0_27 = arith.constant 0 : index
    %c0_28 = arith.constant 0 : index
    %47 = vector.load %arg11[%c0_25, %c0_26, %c0_27, %c0_28] : memref<1x1x10x128xf32, #tpu.memory_space<vmem>>, vector<1x1x10x128xf32>
    %48 = vector.shape_cast %47 : vector<1x1x10x128xf32> to vector<1x10x128xf32>
    %49 = vector.shape_cast %46 : vector<1x10x128xf32> to vector<1x1x10x128xf32>
    tpu.vector_store %arg11[%c0_25, %c0_26, %c0_27, %c0_28], %49 {strides = array<i32>} : memref<1x1x10x128xf32, #tpu.memory_space<vmem>>, vector<1x1x10x128xf32>,
    return
  }
  func.func @transform_0(%arg0: i32) -> (i32, i32, i32) {
    %c0_i32 = arith.constant 0 : i32
    %c0_i32_0 = arith.constant 0 : i32
    %c0_i32_1 = arith.constant 0 : i32
    return %arg0, %c0_i32, %c0_i32_0 : i32, i32, i32
  }
  func.func @transform_1(%arg0: i32) -> (i32, i32) {
    %c0_i32 = arith.constant 0 : i32
    %c0_i32_0 = arith.constant 0 : i32
    %c0_i32_1 = arith.constant 0 : i32
    return %c0_i32, %c0_i32_0 : i32, i32
  }
  func.func @transform_2(%arg0: i32) -> (i32, i32) {
    %c0_i32 = arith.constant 0 : i32
    %c0_i32_0 = arith.constant 0 : i32
    %c0_i32_1 = arith.constant 0 : i32
    return %c0_i32, %c0_i32_0 : i32, i32
  }
  func.func @transform_3(%arg0: i32) -> (i32, i32) {
    %c0_i32 = arith.constant 0 : i32
    %c0_i32_0 = arith.constant 0 : i32
    %c0_i32_1 = arith.constant 0 : i32
    return %c0_i32, %c0_i32_0 : i32, i32
  }
  func.func @transform_4(%arg0: i32) -> (i32, i32) {
    %c0_i32 = arith.constant 0 : i32
    %c0_i32_0 = arith.constant 0 : i32
    %c0_i32_1 = arith.constant 0 : i32
    return %c0_i32, %c0_i32_0 : i32, i32
  }
  func.func @transform_5(%arg0: i32) -> (i32, i32) {
    %c0_i32 = arith.constant 0 : i32
    %c0_i32_0 = arith.constant 0 : i32
    %c0_i32_1 = arith.constant 0 : i32
    return %c0_i32, %c0_i32_0 : i32, i32
  }
  func.func @transform_6(%arg0: i32) -> (i32, i32) {
    %c0_i32 = arith.constant 0 : i32
    %c0_i32_0 = arith.constant 0 : i32
    %c0_i32_1 = arith.constant 0 : i32
    return %c0_i32, %c0_i32_0 : i32, i32
  }
  func.func @transform_7(%arg0: i32) -> (i32, i32) {
    %c0_i32 = arith.constant 0 : i32
    %c0_i32_0 = arith.constant 0 : i32
    %c0_i32_1 = arith.constant 0 : i32
    return %c0_i32, %c0_i32_0 : i32, i32
  }
  func.func @transform_8(%arg0: i32) -> (i32, i32) {
    %c0_i32 = arith.constant 0 : i32
    %c0_i32_0 = arith.constant 0 : i32
    %c0_i32_1 = arith.constant 0 : i32
    return %c0_i32, %c0_i32_0 : i32, i32
  }
  func.func @transform_9(%arg0: i32) -> (i32, i32) {
    %c0_i32 = arith.constant 0 : i32
    %c0_i32_0 = arith.constant 0 : i32
    %c0_i32_1 = arith.constant 0 : i32
    return %c0_i32, %c0_i32_0 : i32, i32
  }
  func.func @transform_10(%arg0: i32) -> (i32, i32, i32, i32) {
    %c0_i32 = arith.constant 0 : i32
    %c0_i32_0 = arith.constant 0 : i32
    %c0_i32_1 = arith.constant 0 : i32
    %c0_i32_2 = arith.constant 0 : i32
    return %arg0, %c0_i32, %c0_i32_0, %c0_i32_1 : i32, i32, i32, i32
  }
}

</mosaic_0001>

<llo_original>
// kernel: tpu_custom_call.1
$region0: #{tpu_custom_call.1}
  #allocation0 [shape = 'u32[]', space=smem, size = 0x4, offset = 0x4, fixed_abs, tag = 'smem constant byte address 0x4 - core index']
  #allocation1 [shape = 'u32[144,128]{1,0:T(1,128)}', space=vmem, size = 0x12000, scoped, tag = 'internal scratch']
  %s0 = inlined_call_operand.vmem [shape: f32[2,16,8], index: 0, kind: input, shape index: {}]
  %s1 = inlined_call_operand.vmem [shape: f32[8,64], index: 1, kind: input, shape index: {}]
  %s2 = inlined_call_operand.hbm [shape: f32[192,128], index: 2, kind: input, shape index: {}]
  %s3 = inlined_call_operand.hbm [shape: f32[640,128], index: 3, kind: input, shape index: {}]
  %s4 = inlined_call_operand.vmem [shape: f32[1,64], index: 4, kind: input, shape index: {}]
  %s5 = inlined_call_operand.vmem [shape: f32[1,64], index: 5, kind: input, shape index: {}]
  %s6 = inlined_call_operand.vmem [shape: f32[1,128], index: 6, kind: input, shape index: {}]
  %s7 = inlined_call_operand.vmem [shape: f32[1,128], index: 7, kind: input, shape index: {}]
  %s8 = inlined_call_operand.vmem [shape: f32[1,128], index: 8, kind: input, shape index: {}]
  %s9 = inlined_call_operand.vmem [shape: f32[1,128], index: 9, kind: input, shape index: {}]
  %s10 = inlined_call_operand.vmem [shape: f32[2,1,10,128], index: 10, kind: output, shape index: {}]
  %s11 = sld [smem:[#allocation0]]
  $region81: #{tpu_custom_call.1} parent=0
    _
  %s13 = ssub.s32 1, %s11
  %s14 = scalar_select 0, %s13, %s11
  $region1: #{tpu_custom_call.1} parent=0
    #allocation2 [shape = 'u8[98304]{0}', space=vmem, size = 0x18000, scoped, tag = 'input window, operand 2, single buffered']
    #allocation3 [shape = 's32[2]{0}', space=sflag, size = 0x8, scoped, tag = 'scoped memory for tpu_custom_call.1']
    #allocation4 [shape = 'u8[327680]{0}', space=vmem, size = 0x50000, scoped, tag = 'input window, operand 3, single buffered']
    #allocation5 [shape = 's32[1]{0}', space=sflag, size = 0x4, scoped, tag = 'scoped memory for tpu_custom_call.1']
    %15 = vsyncpa [#allocation3], 0
    %16 = vsyncpa [#allocation5], 0
    loop: start=0, step=1, limit=4
    $region2: #{tpu_custom_call.1} parent=1 // loop_pre_header
      _
    $region3: #{tpu_custom_call.1} parent=1 // loop_header
      %s18 = sphi 0, %s22
      %p19 = scmp.ge.s32.totalorder %s18, 4
      %s28 = sphi 0, %s30
      %s31 = sphi 0, %s28
      %s32 = sphi 0, %s31
      %s48 = sphi 0, %s32
      %s52 = sphi 0, %s52
      %s54 = sphi 0, %s52
      %s55 = sphi 0, %s54
      %s69 = sphi 0, %s55
      %s73 = sphi 0, %s73
      %s75 = sphi 0, %s73
      %s76 = sphi 0, %s75
      %s90 = sphi 0, %s76
      %s94 = sphi 0, %s94
      %s96 = sphi 0, %s94
      %s97 = sphi 0, %s96
      %s111 = sphi 0, %s97
      %s115 = sphi 0, %s115
      %s117 = sphi 0, %s115
      %s118 = sphi 0, %s117
      %s132 = sphi 0, %s118
      %s136 = sphi 0, %s136
      %s138 = sphi 0, %s136
      %s139 = sphi 0, %s138
      %s153 = sphi 0, %s139
      %s157 = sphi 0, %s157
      %s159 = sphi 0, %s157
      %s160 = sphi 0, %s159
      %s174 = sphi 0, %s160
      %s178 = sphi 0, %s178
      %s180 = sphi 0, %s178
      %s181 = sphi 0, %s180
      %s195 = sphi 0, %s181
      %s199 = sphi 0, %s199
      %s201 = sphi 0, %s199
      %s202 = sphi 0, %s201
      %s216 = sphi 0, %s202
      %s220 = sphi 0, %s220
      %s222 = sphi 0, %s220
      %s223 = sphi 0, %s222
      %s237 = sphi 0, %s223
      %s243 = sphi 0, %s245
      %s246 = sphi 0, %s243
      %s247 = sphi 0, %s246
      %s263 = sphi 0, %s247
    $region4: #{tpu_custom_call.1} parent=1 // loop_header_branch
      %21 = sbr.rel (%p19) target = $region8
    $region5: #{tpu_custom_call.1} parent=1 // loop_body
      %s23 = ssub.s32 %s18, 1
      %s24 = ssub.s32 %s18, 2
      %s25 = sadd.s32 %s18, 1
      %s26 = ssub.s32 %s18, %s25
      %p27 = scmp.eq.s32.totalorder %s26, 0
      %s29 = sadd.s32 %s28, 1
      %s30 = scalar_select %p27, %s28, %s29
      %p33 = pneg %p27
      %p34 = scmp.eq.s32.totalorder %s18, 1
      %p35 = por %p33, %p34
      %p36 = scmp.ne.s32.totalorder %s28, %s31
      %p37 = scmp.eq.s32.totalorder %s18, 0
      %p38 = por %p36, %p37
      %p39 = scmp.ne.s32.totalorder %s28, %s31
      %p40 = scmp.eq.s32.totalorder %s23, 1
      %p41 = por %p39, %p40
      %p42 = scmp.ne.s32.totalorder %s31, %s32
      %p43 = scmp.eq.s32.totalorder %s23, 0
      %p44 = por %p42, %p43
      %p45 = scmp.ne.s32.totalorder %s31, %s32
      %p46 = scmp.eq.s32.totalorder %s24, 1
      %p47 = por %p45, %p46
      %p49 = scmp.ne.s32.totalorder %s32, %s48
      %p50 = scmp.eq.s32.totalorder %s24, 0
      %p51 = por %p49, %p50
      %s53 = sadd.s32 %s52, 1
      %p56 = scmp.eq.s32.totalorder %s18, 1
      %p57 = scmp.ne.s32.totalorder %s52, %s54
      %p58 = scmp.eq.s32.totalorder %s18, 0
      %p59 = por %p57, %p58
      %p60 = scmp.ne.s32.totalorder %s52, %s54
      %p61 = scmp.eq.s32.totalorder %s23, 1
      %p62 = por %p60, %p61
      %p63 = scmp.ne.s32.totalorder %s54, %s55
      %p64 = scmp.eq.s32.totalorder %s23, 0
      %p65 = por %p63, %p64
      %p66 = scmp.ne.s32.totalorder %s54, %s55
      %p67 = scmp.eq.s32.totalorder %s24, 1
      %p68 = por %p66, %p67
      %p70 = scmp.ne.s32.totalorder %s55, %s69
      %p71 = scmp.eq.s32.totalorder %s24, 0
      %p72 = por %p70, %p71
      %s74 = sadd.s32 %s73, 1
      %p77 = scmp.eq.s32.totalorder %s18, 1
      %p78 = scmp.ne.s32.totalorder %s73, %s75
      %p79 = scmp.eq.s32.totalorder %s18, 0
      %p80 = por %p78, %p79
      %p81 = scmp.ne.s32.totalorder %s73, %s75
      %p82 = scmp.eq.s32.totalorder %s23, 1
      %p83 = por %p81, %p82
      %p84 = scmp.ne.s32.totalorder %s75, %s76
      %p85 = scmp.eq.s32.totalorder %s23, 0
      %p86 = por %p84, %p85
      %p87 = scmp.ne.s32.totalorder %s75, %s76
      %p88 = scmp.eq.s32.totalorder %s24, 1
      %p89 = por %p87, %p88
      %p91 = scmp.ne.s32.totalorder %s76, %s90
      %p92 = scmp.eq.s32.totalorder %s24, 0
      %p93 = por %p91, %p92
      %s95 = sadd.s32 %s94, 1
      %p98 = scmp.eq.s32.totalorder %s18, 1
      %p99 = scmp.ne.s32.totalorder %s94, %s96
      %p100 = scmp.eq.s32.totalorder %s18, 0
      %p101 = por %p99, %p100
      %p102 = scmp.ne.s32.totalorder %s94, %s96
      %p103 = scmp.eq.s32.totalorder %s23, 1
      %p104 = por %p102, %p103
      %p105 = scmp.ne.s32.totalorder %s96, %s97
      %p106 = scmp.eq.s32.totalorder %s23, 0
      %p107 = por %p105, %p106
      %p108 = scmp.ne.s32.totalorder %s96, %s97
      %p109 = scmp.eq.s32.totalorder %s24, 1
      %p110 = por %p108, %p109
      %p112 = scmp.ne.s32.totalorder %s97, %s111
      %p113 = scmp.eq.s32.totalorder %s24, 0
      %p114 = por %p112, %p113
      %s116 = sadd.s32 %s115, 1
      %p119 = scmp.eq.s32.totalorder %s18, 1
      %p120 = scmp.ne.s32.totalorder %s115, %s117
      %p121 = scmp.eq.s32.totalorder %s18, 0
      %p122 = por %p120, %p121
      %p123 = scmp.ne.s32.totalorder %s115, %s117
      %p124 = scmp.eq.s32.totalorder %s23, 1
      %p125 = por %p123, %p124
      %p126 = scmp.ne.s32.totalorder %s117, %s118
      %p127 = scmp.eq.s32.totalorder %s23, 0
      %p128 = por %p126, %p127
      %p129 = scmp.ne.s32.totalorder %s117, %s118
      %p130 = scmp.eq.s32.totalorder %s24, 1
      %p131 = por %p129, %p130
      %p133 = scmp.ne.s32.totalorder %s118, %s132
      %p134 = scmp.eq.s32.totalorder %s24, 0
      %p135 = por %p133, %p134
      %s137 = sadd.s32 %s136, 1
      %p140 = scmp.eq.s32.totalorder %s18, 1
      %p141 = scmp.ne.s32.totalorder %s136, %s138
      %p142 = scmp.eq.s32.totalorder %s18, 0
      %p143 = por %p141, %p142
      %p144 = scmp.ne.s32.totalorder %s136, %s138
      %p145 = scmp.eq.s32.totalorder %s23, 1
      %p146 = por %p144, %p145
      %p147 = scmp.ne.s32.totalorder %s138, %s139
      %p148 = scmp.eq.s32.totalorder %s23, 0
      %p149 = por %p147, %p148
      %p150 = scmp.ne.s32.totalorder %s138, %s139
      %p151 = scmp.eq.s32.totalorder %s24, 1
      %p152 = por %p150, %p151
      %p154 = scmp.ne.s32.totalorder %s139, %s153
      %p155 = scmp.eq.s32.totalorder %s24, 0
      %p156 = por %p154, %p155
      %s158 = sadd.s32 %s157, 1
      %p161 = scmp.eq.s32.totalorder %s18, 1
      %p162 = scmp.ne.s32.totalorder %s157, %s159
      %p163 = scmp.eq.s32.totalorder %s18, 0
      %p164 = por %p162, %p163
      %p165 = scmp.ne.s32.totalorder %s157, %s159
      %p166 = scmp.eq.s32.totalorder %s23, 1
      %p167 = por %p165, %p166
      %p168 = scmp.ne.s32.totalorder %s159, %s160
      %p169 = scmp.eq.s32.totalorder %s23, 0
      %p170 = por %p168, %p169
      %p171 = scmp.ne.s32.totalorder %s159, %s160
      %p172 = scmp.eq.s32.totalorder %s24, 1
      %p173 = por %p171, %p172
      %p175 = scmp.ne.s32.totalorder %s160, %s174
      %p176 = scmp.eq.s32.totalorder %s24, 0
      %p177 = por %p175, %p176
      %s179 = sadd.s32 %s178, 1
      %p182 = scmp.eq.s32.totalorder %s18, 1
      %p183 = scmp.ne.s32.totalorder %s178, %s180
      %p184 = scmp.eq.s32.totalorder %s18, 0
      %p185 = por %p183, %p184
      %p186 = scmp.ne.s32.totalorder %s178, %s180
      %p187 = scmp.eq.s32.totalorder %s23, 1
      %p188 = por %p186, %p187
      %p189 = scmp.ne.s32.totalorder %s180, %s181
      %p190 = scmp.eq.s32.totalorder %s23, 0
      %p191 = por %p189, %p190
      %p192 = scmp.ne.s32.totalorder %s180, %s181
      %p193 = scmp.eq.s32.totalorder %s24, 1
      %p194 = por %p192, %p193
      %p196 = scmp.ne.s32.totalorder %s181, %s195
      %p197 = scmp.eq.s32.totalorder %s24, 0
      %p198 = por %p196, %p197
      %s200 = sadd.s32 %s199, 1
      %p203 = scmp.eq.s32.totalorder %s18, 1
      %p204 = scmp.ne.s32.totalorder %s199, %s201
      %p205 = scmp.eq.s32.totalorder %s18, 0
      %p206 = por %p204, %p205
      %p207 = scmp.ne.s32.totalorder %s199, %s201
      %p208 = scmp.eq.s32.totalorder %s23, 1
      %p209 = por %p207, %p208
      %p210 = scmp.ne.s32.totalorder %s201, %s202
      %p211 = scmp.eq.s32.totalorder %s23, 0
      %p212 = por %p210, %p211
      %p213 = scmp.ne.s32.totalorder %s201, %s202
      %p214 = scmp.eq.s32.totalorder %s24, 1
      %p215 = por %p213, %p214
      %p217 = scmp.ne.s32.totalorder %s202, %s216
      %p218 = scmp.eq.s32.totalorder %s24, 0
      %p219 = por %p217, %p218
      %s221 = sadd.s32 %s220, 1
      %p224 = scmp.eq.s32.totalorder %s18, 1
      %p225 = scmp.ne.s32.totalorder %s220, %s222
      %p226 = scmp.eq.s32.totalorder %s18, 0
      %p227 = por %p225, %p226
      %p228 = scmp.ne.s32.totalorder %s220, %s222
      %p229 = scmp.eq.s32.totalorder %s23, 1
      %p230 = por %p228, %p229
      %p231 = scmp.ne.s32.totalorder %s222, %s223
      %p232 = scmp.eq.s32.totalorder %s23, 0
      %p233 = por %p231, %p232
      %p234 = scmp.ne.s32.totalorder %s222, %s223
      %p235 = scmp.eq.s32.totalorder %s24, 1
      %p236 = por %p234, %p235
      %p238 = scmp.ne.s32.totalorder %s223, %s237
      %p239 = scmp.eq.s32.totalorder %s24, 0
      %p240 = por %p238, %p239
      %s241 = ssub.s32 %s18, %s25
      %p242 = scmp.eq.s32.totalorder %s241, 0
      %s244 = sadd.s32 %s243, 1
      %s245 = scalar_select %p242, %s243, %s244
      %p248 = pneg %p242
      %p249 = scmp.eq.s32.totalorder %s18, 1
      %p250 = por %p248, %p249
      %p251 = scmp.ne.s32.totalorder %s243, %s246
      %p252 = scmp.eq.s32.totalorder %s18, 0
      %p253 = por %p251, %p252
      %p254 = scmp.ne.s32.totalorder %s243, %s246
      %p255 = scmp.eq.s32.totalorder %s23, 1
      %p256 = por %p254, %p255
      %p257 = scmp.ne.s32.totalorder %s246, %s247
      %p258 = scmp.eq.s32.totalorder %s23, 0
      %p259 = por %p257, %p258
      %p260 = scmp.ne.s32.totalorder %s246, %s247
      %p261 = scmp.eq.s32.totalorder %s24, 1
      %p262 = por %p260, %p261
      %p264 = scmp.ne.s32.totalorder %s247, %s263
      %p265 = scmp.eq.s32.totalorder %s24, 0
      %p266 = por %p264, %p265
      %p267 = scmp.le.s32.totalorder 1, %s18
      %p268 = scmp.lt.s32.totalorder %s18, 3
      %p269 = pnand %p267, %p268
      %p270 = pneg %p269
      // Predicated region
      $region9: #{tpu_custom_call.1} parent=5 // pred_check
        _
      $region10: #{tpu_custom_call.1} parent=5 // pred_check_branch
        %272 = sbr.rel (%p269) target = $region12
      $region11: #{tpu_custom_call.1} parent=5 // pred_region
        %s273 = ssub.s32 %s18, 1
        // Predicated region
        $region13: #{tpu_custom_call.1} parent=11 // pred_check
          %p274 = pneg %p65
        $region14: #{tpu_custom_call.1} parent=11 // pred_check_branch
          %276 = sbr.rel (%p274) target = $region16
        $region15: #{tpu_custom_call.1} parent=11 // pred_region
          _
        $region16: #{tpu_custom_call.1} parent=11 // pred_fallthru
          _
        // Predicated region
        $region17: #{tpu_custom_call.1} parent=11 // pred_check
          %p277 = pneg %p86
        $region18: #{tpu_custom_call.1} parent=11 // pred_check_branch
          %279 = sbr.rel (%p277) target = $region20
        $region19: #{tpu_custom_call.1} parent=11 // pred_region
          %s281 = ssub.s32 3072, 3072
          %282 = vsyncadd [#allocation3], %s281
          %s283 = sshll.u32 [#allocation2], 4
          %s284 = int_to_ptr.vmem [resolvable:$true] %s283
          %289 = dma.hbm_to_vmem [thread:$0]  %s2, 3072, %s284, [#allocation3], 128, 128, 8
        $region20: #{tpu_custom_call.1} parent=11 // pred_fallthru
          _
        // Predicated region
        $region21: #{tpu_custom_call.1} parent=11 // pred_check
          %p290 = pneg %p107
        $region22: #{tpu_custom_call.1} parent=11 // pred_check_branch
          %292 = sbr.rel (%p290) target = $region24
        $region23: #{tpu_custom_call.1} parent=11 // pred_region
          %s294 = ssub.s32 10240, 10240
          %295 = vsyncadd [#allocation5], %s294
          %s296 = sshll.u32 [#allocation4], 4
          %s297 = int_to_ptr.vmem [resolvable:$true] %s296
          %302 = dma.hbm_to_vmem [thread:$0]  %s3, 10240, %s297, [#allocation5], 128, 128, 8
        $region24: #{tpu_custom_call.1} parent=11 // pred_fallthru
          _
        // Predicated region
        $region25: #{tpu_custom_call.1} parent=11 // pred_check
          %p303 = pneg %p128
        $region26: #{tpu_custom_call.1} parent=11 // pred_check_branch
          %305 = sbr.rel (%p303) target = $region28
        $region27: #{tpu_custom_call.1} parent=11 // pred_region
          _
        $region28: #{tpu_custom_call.1} parent=11 // pred_fallthru
          _
        // Predicated region
        $region29: #{tpu_custom_call.1} parent=11 // pred_check
          %p306 = pneg %p149
        $region30: #{tpu_custom_call.1} parent=11 // pred_check_branch
          %308 = sbr.rel (%p306) target = $region32
        $region31: #{tpu_custom_call.1} parent=11 // pred_region
          _
        $region32: #{tpu_custom_call.1} parent=11 // pred_fallthru
          _
        // Predicated region
        $region33: #{tpu_custom_call.1} parent=11 // pred_check
          %p309 = pneg %p170
        $region34: #{tpu_custom_call.1} parent=11 // pred_check_branch
          %311 = sbr.rel (%p309) target = $region36
        $region35: #{tpu_custom_call.1} parent=11 // pred_region
          _
        $region36: #{tpu_custom_call.1} parent=11 // pred_fallthru
          _
        // Predicated region
        $region37: #{tpu_custom_call.1} parent=11 // pred_check
          %p312 = pneg %p191
        $region38: #{tpu_custom_call.1} parent=11 // pred_check_branch
          %314 = sbr.rel (%p312) target = $region40
        $region39: #{tpu_custom_call.1} parent=11 // pred_region
          _
        $region40: #{tpu_custom_call.1} parent=11 // pred_fallthru
          _
        // Predicated region
        $region41: #{tpu_custom_call.1} parent=11 // pred_check
          %p315 = pneg %p212
        $region42: #{tpu_custom_call.1} parent=11 // pred_check_branch
          %317 = sbr.rel (%p315) target = $region44
        $region43: #{tpu_custom_call.1} parent=11 // pred_region
          _
        $region44: #{tpu_custom_call.1} parent=11 // pred_fallthru
          _
        // Predicated region
        $region45: #{tpu_custom_call.1} parent=11 // pred_check
          %p318 = pneg %p233
        $region46: #{tpu_custom_call.1} parent=11 // pred_check_branch
          %320 = sbr.rel (%p318) target = $region48
        $region47: #{tpu_custom_call.1} parent=11 // pred_region
          _
        $region48: #{tpu_custom_call.1} parent=11 // pred_fallthru
          _
      $region12: #{tpu_custom_call.1} parent=5 // pred_fallthru
        _
      %p321 = scmp.lt.s32.totalorder %s18, 2
      // Predicated region
      $region49: #{tpu_custom_call.1} parent=5 // pred_check
        %p322 = pneg %p321
      $region50: #{tpu_custom_call.1} parent=5 // pred_check_branch
        %324 = sbr.rel (%p322) target = $region52
      $region51: #{tpu_custom_call.1} parent=5 // pred_region
        // Predicated region
        $region53: #{tpu_custom_call.1} parent=51 // pred_check
          %p325 = pneg %p38
        $region54: #{tpu_custom_call.1} parent=51 // pred_check_branch
          %327 = sbr.rel (%p325) target = $region56
        $region55: #{tpu_custom_call.1} parent=51 // pred_region
          %p328 = scmp.lt.s32.totalorder %s18, 1
          %s329 = scalar_select %p328, %s18, 1
          %s330 = smul.addr %s329, 2
          %s331 = smul.addr %s330, 8
          %s332 = scalar_lea.vmem %s0, %s331
        $region56: #{tpu_custom_call.1} parent=51 // pred_fallthru
          _
      $region52: #{tpu_custom_call.1} parent=5 // pred_fallthru
        _
      %p333 = scmp.le.s32.totalorder 1, %s18
      %p334 = scmp.lt.s32.totalorder %s18, 3
      %p335 = pnand %p333, %p334
      %p336 = pneg %p335
      // Predicated region
      $region57: #{tpu_custom_call.1} parent=5 // pred_check
        _
      $region58: #{tpu_custom_call.1} parent=5 // pred_check_branch
        %338 = sbr.rel (%p335) target = $region60
      $region59: #{tpu_custom_call.1} parent=5 // pred_region
        %s339 = ssub.s32 %s18, 1
        // Predicated region
        $region61: #{tpu_custom_call.1} parent=59 // pred_check
          %p340 = pneg %p86
        $region62: #{tpu_custom_call.1} parent=59 // pred_check_branch
          %342 = sbr.rel (%p340) target = $region64
        $region63: #{tpu_custom_call.1} parent=59 // pred_region
          %343 = dma.done [#allocation3], 3072
        $region64: #{tpu_custom_call.1} parent=59 // pred_fallthru
          _
        // Predicated region
        $region65: #{tpu_custom_call.1} parent=59 // pred_check
          %p344 = pneg %p107
        $region66: #{tpu_custom_call.1} parent=59 // pred_check_branch
          %346 = sbr.rel (%p344) target = $region68
        $region67: #{tpu_custom_call.1} parent=59 // pred_region
          %347 = dma.done [#allocation5], 10240
        $region68: #{tpu_custom_call.1} parent=59 // pred_fallthru
          _
        %p348 = scmp.lt.s32.totalorder %s23, 1
        %s349 = scalar_select %p348, %s23, 1
        %s350 = smul.addr %s349, 2
        %s351 = smul.addr %s350, 8
        %s352 = scalar_lea.vmem %s0, %s351
        %p353 = pneg %p44
        %p354 = pneg %p41
        %p355 = pneg %p65
        %p356 = pneg %p62
        %p357 = pneg %p86
        %p358 = pneg %p83
        %p359 = pneg %p107
        %p360 = pneg %p104
        %p361 = pneg %p128
        %p362 = pneg %p125
        %p363 = pneg %p149
        %p364 = pneg %p146
        %p365 = pneg %p170
        %p366 = pneg %p167
        %p367 = pneg %p191
        %p368 = pneg %p188
        %p369 = pneg %p212
        %p370 = pneg %p209
        %p371 = pneg %p233
        %p372 = pneg %p230
        %p373 = pneg %p259
        %p374 = pneg %p256
        %p375 = scmp.lt.s32.totalorder %s23, 1
        %s376 = scalar_select %p375, %s23, 1
        %s377 = smul.addr %s376, 2
        %s378 = smul.addr %s377, 8
        %s379 = scalar_lea.vmem %s10, %s378
        %p380 = scmp.lt.s32.totalorder %s23, 1
        %s381 = scalar_select %p380, %s23, 1
        %s382 = smul.addr %s381, 2
        %s383 = smul.addr %s382, 8
        %s384 = scalar_lea.vmem %s0, %s383
        %p385 = scmp.lt.s32.totalorder %s23, 1
        %s386 = scalar_select %p385, %s23, 1
        %s387 = smul.addr %s386, 2
        %s388 = smul.addr %s387, 8
        %s389 = scalar_lea.vmem %s10, %s388
        %v390 = vld [vmem:[%s384] sm:$0xff]
        %v391 = vld [vmem:[%s384 + $0x8] sm:$0xff]
        %v392 = vld [vmem:[%s1] sm:$0xff]
        %vm393 = vcmask 64512
        %v395 = vsel %vm393, %v390, 0
        %v398 = vsel %vm393, %v391, 0
        %400 = vmatprep.subr.mxu0 0.0
        %401 = vmatpush1.msra.mxu0 0.0
        %402 = vmatprep.subr.mxu0 0.0
        %403 = vmatpush1.msra.mxu0 0.0
        %404 = vmatprep.subr.mxu0 0.0
        %405 = vmatpush1.msra.mxu0 0.0
        %406 = vmatprep.subr.mxu0 0.0
        %407 = vmatpush1.msra.mxu0 0.0
        %408 = vmatprep.subr.mxu0 0.0
        %409 = vmatpush1.msra.mxu0 0.0
        %410 = vmatprep.subr.mxu0 0.0
        %411 = vmatpush1.msra.mxu0 0.0
        %412 = vmatprep.subr.mxu0 0.0
        %413 = vmatpush1.msra.mxu0 0.0
        %414 = vmatprep.subr.mxu0 0.0
        %415 = vmatpush1.msra.mxu0 0.0
        %416 = vmatprep.subr.mxu0 0.0
        %417 = vmatpush1.msra.mxu0 0.0
        %418 = vmatprep.subr.mxu0 0.0
        %419 = vmatpush1.msra.mxu0 0.0
        %420 = vmatprep.subr.mxu0 0.0
        %421 = vmatpush1.msra.mxu0 0.0
        %422 = vmatprep.subr.mxu0 0.0
        %423 = vmatpush1.msra.mxu0 0.0
        %424 = vmatprep.subr.mxu0 0.0
        %425 = vmatpush1.msra.mxu0 0.0
        %426 = vmatprep.subr.mxu0 0.0
        %427 = vmatpush1.msra.mxu0 0.0
        %428 = vmatprep.subr.mxu0 0.0
        %429 = vmatpush1.msra.mxu0 0.0
        %430 = vmatprep.subr.mxu0 0.0
        %431 = vmatpush1.msra.mxu0 %v392
        %432 = vmatprep.subr.mxu0 0.0
        %433 = vmatpush2.msra.mxu0 0.0
        %434 = vmatprep.subr.mxu0 0.0
        %435 = vmatpush2.msra.mxu0 0.0
        %436 = vmatprep.subr.mxu0 0.0
        %437 = vmatpush2.msra.mxu0 0.0
        %438 = vmatprep.subr.mxu0 0.0
        %439 = vmatpush2.msra.mxu0 0.0
        %440 = vmatprep.subr.mxu0 0.0
        %441 = vmatpush2.msra.mxu0 0.0
        %442 = vmatprep.subr.mxu0 0.0
        %443 = vmatpush2.msra.mxu0 0.0
        %444 = vmatprep.subr.mxu0 0.0
        %445 = vmatpush2.msra.mxu0 0.0
        %446 = vmatprep.subr.mxu0 0.0
        %447 = vmatpush2.msra.mxu0 0.0
        %448 = vmatprep.subr.mxu0 0.0
        %449 = vmatpush2.msra.mxu0 0.0
        %450 = vmatprep.subr.mxu0 0.0
        %451 = vmatpush2.msra.mxu0 0.0
        %452 = vmatprep.subr.mxu0 0.0
        %453 = vmatpush2.msra.mxu0 0.0
        %454 = vmatprep.subr.mxu0 0.0
        %455 = vmatpush2.msra.mxu0 0.0
        %456 = vmatprep.subr.mxu0 0.0
        %457 = vmatpush2.msra.mxu0 0.0
        %458 = vmatprep.subr.mxu0 0.0
        %459 = vmatpush2.msra.mxu0 0.0
        %460 = vmatprep.subr.mxu0 0.0
        %461 = vmatpush2.msra.mxu0 0.0
        %462 = vmatprep.subr.mxu0 0.0
        %463 = vmatpush2.msra.mxu0 0.0
        %464 = vmatprep.mubr.f32.mxu0 0.0
        %465 = vmatmul.mubr.f32.gmra.mxu0 %v395
        %v466 = vpop.f32.mrf.mxu0
        %v467 = vadd.f32 0.0, %v466
        %v468 = vpop.f32.mrf.mxu0
        %469 = vmatprep.mubr.f32.mxu0 0.0
        %470 = vmatmul.mubr.f32.gmra.mxu0 %v398
        %v471 = vpop.f32.mrf.mxu0
        %v472 = vadd.f32 0.0, %v471
        %v473 = vpop.f32.mrf.mxu0
        %474 = vdwg.mxu0
        %v475 = vld [vmem:[%s4] sm:$0x1]
        %v477 = vlaneseq
        %v478 = vshrl.u32 %v477, 7
        %v479 = vsub.s32 0, %v478
        %v480 = vrot.slane %v475, %v479
        %v482 = vmul.f32 %v467, %v480
        %v483 = vmul.f32 %v472, %v480
        %v484 = vld [vmem:[%s5] sm:$0x1]
        %v486 = vlaneseq
        %v487 = vshrl.u32 %v486, 7
        %v488 = vsub.s32 0, %v487
        %v489 = vrot.slane %v484, %v488
        %v491 = vadd.f32 %v482, %v489
        %v492 = vadd.f32 %v483, %v489
        %v493 = vmax.f32 %v491, 0.0
        %v494 = vmax.f32 %v492, 0.0
        %vm497 = vcmask 1046528
        %v498 = vrot.slane %v493, 1
        %v499 = vrot.slane %v494, 1
        %v500 = vsel %vm497, %v498, %v499
        %501 = vrot.lane.b32.xlu0 %v500, 64
        %v502 = vpop.permute.xlu0 %501
        %503 = vrot.lane.b32.xlu0 %v499, 64
        %v504 = vpop.permute.xlu0 %503
        %vm507 = vcmask 1045504
        %v508 = vrot.slane %v493, 2
        %v509 = vrot.slane %v494, 2
        %v510 = vsel %vm507, %v508, %v509
        %vm511 = vcmask 523264
        %v512 = vsel %vm511, %v493, %v502
        %v513 = vsel %vm511, %v494, %v504
        %v514 = vld [vmem:[#allocation2] sm:$0xff]
        %v515 = vld [vmem:[#allocation2 + $0x8] sm:$0xff]
        %v516 = vld [vmem:[#allocation2 + $0x10] sm:$0xff]
        %v517 = vld [vmem:[#allocation2 + $0x18] sm:$0xff]
        %v518 = vld [vmem:[#allocation2 + $0x20] sm:$0xff]
        %v519 = vld [vmem:[#allocation2 + $0x28] sm:$0xff]
        %v520 = vld [vmem:[#allocation2 + $0x30] sm:$0xff]
        %v521 = vld [vmem:[#allocation2 + $0x38] sm:$0xff]
        %v522 = vld [vmem:[#allocation2 + $0x40] sm:$0xff]
        %v523 = vld [vmem:[#allocation2 + $0x48] sm:$0xff]
        %v524 = vld [vmem:[#allocation2 + $0x50] sm:$0xff]
        %v525 = vld [vmem:[#allocation2 + $0x58] sm:$0xff]
        %v526 = vld [vmem:[#allocation2 + $0x60] sm:$0xff]
        %v527 = vld [vmem:[#allocation2 + $0x68] sm:$0xff]
        %v528 = vld [vmem:[#allocation2 + $0x70] sm:$0xff]
        %v529 = vld [vmem:[#allocation2 + $0x78] sm:$0xff]
        %v530 = vld [vmem:[#allocation2 + $0x80] sm:$0xff]
        %v531 = vld [vmem:[#allocation2 + $0x88] sm:$0xff]
        %v532 = vld [vmem:[#allocation2 + $0x90] sm:$0xff]
        %v533 = vld [vmem:[#allocation2 + $0x98] sm:$0xff]
        %v534 = vld [vmem:[#allocation2 + $0xa0] sm:$0xff]
        %v535 = vld [vmem:[#allocation2 + $0xa8] sm:$0xff]
        %v536 = vld [vmem:[#allocation2 + $0xb0] sm:$0xff]
        %v537 = vld [vmem:[#allocation2 + $0xb8] sm:$0xff]
        %v538 = vsel %vm511, %v510, 0
        %v540 = vsel %vm511, %v509, 0
        %542 = vmatprep.subr.mxu0 0.0
        %543 = vmatpush1.msra.mxu0 %v529
        %544 = vmatprep.subr.mxu0 0.0
        %545 = vmatpush1.msra.mxu0 %v528
        %546 = vmatprep.subr.mxu0 0.0
        %547 = vmatpush1.msra.mxu0 %v527
        %548 = vmatprep.subr.mxu0 0.0
        %549 = vmatpush1.msra.mxu0 %v526
        %550 = vmatprep.subr.mxu0 0.0
        %551 = vmatpush1.msra.mxu0 %v525
        %552 = vmatprep.subr.mxu0 0.0
        %553 = vmatpush1.msra.mxu0 %v524
        %554 = vmatprep.subr.mxu0 0.0
        %555 = vmatpush1.msra.mxu0 %v523
        %556 = vmatprep.subr.mxu0 0.0
        %557 = vmatpush1.msra.mxu0 %v522
        %558 = vmatprep.subr.mxu0 0.0
        %559 = vmatpush1.msra.mxu0 %v521
        %560 = vmatprep.subr.mxu0 0.0
        %561 = vmatpush1.msra.mxu0 %v520
        %562 = vmatprep.subr.mxu0 0.0
        %563 = vmatpush1.msra.mxu0 %v519
        %564 = vmatprep.subr.mxu0 0.0
        %565 = vmatpush1.msra.mxu0 %v518
        %566 = vmatprep.subr.mxu0 0.0
        %567 = vmatpush1.msra.mxu0 %v517
        %568 = vmatprep.subr.mxu0 0.0
        %569 = vmatpush1.msra.mxu0 %v516
        %570 = vmatprep.subr.mxu0 0.0
        %571 = vmatpush1.msra.mxu0 %v515
        %572 = vmatprep.subr.mxu0 0.0
        %573 = vmatpush1.msra.mxu0 %v514
        %574 = vmatprep.subr.mxu0 0.0
        %575 = vmatpush2.msra.mxu0 0.0
        %576 = vmatprep.subr.mxu0 0.0
        %577 = vmatpush2.msra.mxu0 0.0
        %578 = vmatprep.subr.mxu0 0.0
        %579 = vmatpush2.msra.mxu0 0.0
        %580 = vmatprep.subr.mxu0 0.0
        %581 = vmatpush2.msra.mxu0 0.0
        %582 = vmatprep.subr.mxu0 0.0
        %583 = vmatpush2.msra.mxu0 0.0
        %584 = vmatprep.subr.mxu0 0.0
        %585 = vmatpush2.msra.mxu0 0.0
        %586 = vmatprep.subr.mxu0 0.0
        %587 = vmatpush2.msra.mxu0 0.0
        %588 = vmatprep.subr.mxu0 0.0
        %589 = vmatpush2.msra.mxu0 0.0
        %590 = vmatprep.subr.mxu0 0.0
        %591 = vmatpush2.msra.mxu0 %v537
        %592 = vmatprep.subr.mxu0 0.0
        %593 = vmatpush2.msra.mxu0 %v536
        %594 = vmatprep.subr.mxu0 0.0
        %595 = vmatpush2.msra.mxu0 %v535
        %596 = vmatprep.subr.mxu0 0.0
        %597 = vmatpush2.msra.mxu0 %v534
        %598 = vmatprep.subr.mxu0 0.0
        %599 = vmatpush2.msra.mxu0 %v533
        %600 = vmatprep.subr.mxu0 0.0
        %601 = vmatpush2.msra.mxu0 %v532
        %602 = vmatprep.subr.mxu0 0.0
        %603 = vmatpush2.msra.mxu0 %v531
        %604 = vmatprep.subr.mxu0 0.0
        %605 = vmatpush2.msra.mxu0 %v530
        %606 = vmatprep.mubr.f32.mxu0 %v538
        %607 = vmatmul.mubr.f32.gmra.mxu0 %v512
        %v608 = vpop.f32.mrf.mxu0
        %v609 = vadd.f32 0.0, %v608
        %v610 = vpop.f32.mrf.mxu0
        %611 = vmatprep.mubr.f32.mxu0 %v540
        %612 = vmatmul.mubr.f32.gmra.mxu0 %v513
        %v613 = vpop.f32.mrf.mxu0
        %v614 = vadd.f32 0.0, %v613
        %v615 = vpop.f32.mrf.mxu0
        %616 = vdwg.mxu0
        %v617 = vld [vmem:[%s6] sm:$0x1]
        %v619 = vlaneseq
        %v620 = vshrl.u32 %v619, 7
        %v621 = vsub.s32 0, %v620
        %v622 = vrot.slane %v617, %v621
        %v624 = vmul.f32 %v609, %v622
        %v625 = vmul.f32 %v614, %v622
        %v626 = vld [vmem:[%s7] sm:$0x1]
        %v628 = vlaneseq
        %v629 = vshrl.u32 %v628, 7
        %v630 = vsub.s32 0, %v629
        %v631 = vrot.slane %v626, %v630
        %v633 = vadd.f32 %v624, %v631
        %v634 = vadd.f32 %v625, %v631
        %v635 = vmax.f32 %v633, 0.0
        %v636 = vmax.f32 %v634, 0.0
        %v639 = vrot.slane %v635, 1
        %v640 = vrot.slane %v636, 1
        %v641 = vsel %vm497, %v639, %v640
        %v644 = vrot.slane %v635, 2
        %v645 = vrot.slane %v636, 2
        %v646 = vsel %vm507, %v644, %v645
        %vm649 = vcmask 1044480
        %v650 = vrot.slane %v635, 3
        %v651 = vrot.slane %v636, 3
        %v652 = vsel %vm649, %v650, %v651
        %vm655 = vcmask 1043456
        %v656 = vrot.slane %v635, 4
        %v657 = vrot.slane %v636, 4
        %v658 = vsel %vm655, %v656, %v657
        %v661 = vld [vmem:[#allocation4] sm:$0xff]
        %v662 = vld [vmem:[#allocation4 + $0x8] sm:$0xff]
        %v663 = vld [vmem:[#allocation4 + $0x10] sm:$0xff]
        %v664 = vld [vmem:[#allocation4 + $0x18] sm:$0xff]
        %v665 = vld [vmem:[#allocation4 + $0x20] sm:$0xff]
        %v666 = vld [vmem:[#allocation4 + $0x28] sm:$0xff]
        %v667 = vld [vmem:[#allocation4 + $0x30] sm:$0xff]
        %v668 = vld [vmem:[#allocation4 + $0x38] sm:$0xff]
        %v669 = vld [vmem:[#allocation4 + $0x40] sm:$0xff]
        %v670 = vld [vmem:[#allocation4 + $0x48] sm:$0xff]
        %v671 = vld [vmem:[#allocation4 + $0x50] sm:$0xff]
        %v672 = vld [vmem:[#allocation4 + $0x58] sm:$0xff]
        %v673 = vld [vmem:[#allocation4 + $0x60] sm:$0xff]
        %v674 = vld [vmem:[#allocation4 + $0x68] sm:$0xff]
        %v675 = vld [vmem:[#allocation4 + $0x70] sm:$0xff]
        %v676 = vld [vmem:[#allocation4 + $0x78] sm:$0xff]
        %v677 = vld [vmem:[#allocation4 + $0x80] sm:$0xff]
        %v678 = vld [vmem:[#allocation4 + $0x88] sm:$0xff]
        %v679 = vld [vmem:[#allocation4 + $0x90] sm:$0xff]
        %v680 = vld [vmem:[#allocation4 + $0x98] sm:$0xff]
        %v681 = vld [vmem:[#allocation4 + $0xa0] sm:$0xff]
        %v682 = vld [vmem:[#allocation4 + $0xa8] sm:$0xff]
        %v683 = vld [vmem:[#allocation4 + $0xb0] sm:$0xff]
        %v684 = vld [vmem:[#allocation4 + $0xb8] sm:$0xff]
        %v685 = vld [vmem:[#allocation4 + $0xc0] sm:$0xff]
        %v686 = vld [vmem:[#allocation4 + $0xc8] sm:$0xff]
        %v687 = vld [vmem:[#allocation4 + $0xd0] sm:$0xff]
        %v688 = vld [vmem:[#allocation4 + $0xd8] sm:$0xff]
        %v689 = vld [vmem:[#allocation4 + $0xe0] sm:$0xff]
        %v690 = vld [vmem:[#allocation4 + $0xe8] sm:$0xff]
        %v691 = vld [vmem:[#allocation4 + $0xf0] sm:$0xff]
        %v692 = vld [vmem:[#allocation4 + $0xf8] sm:$0xff]
        %v693 = vld [vmem:[#allocation4 + $0x100] sm:$0xff]
        %v694 = vld [vmem:[#allocation4 + $0x108] sm:$0xff]
        %v695 = vld [vmem:[#allocation4 + $0x110] sm:$0xff]
        %v696 = vld [vmem:[#allocation4 + $0x118] sm:$0xff]
        %v697 = vld [vmem:[#allocation4 + $0x120] sm:$0xff]
        %v698 = vld [vmem:[#allocation4 + $0x128] sm:$0xff]
        %v699 = vld [vmem:[#allocation4 + $0x130] sm:$0xff]
        %v700 = vld [vmem:[#allocation4 + $0x138] sm:$0xff]
        %v701 = vld [vmem:[#allocation4 + $0x140] sm:$0xff]
        %v702 = vld [vmem:[#allocation4 + $0x148] sm:$0xff]
        %v703 = vld [vmem:[#allocation4 + $0x150] sm:$0xff]
        %v704 = vld [vmem:[#allocation4 + $0x158] sm:$0xff]
        %v705 = vld [vmem:[#allocation4 + $0x160] sm:$0xff]
        %v706 = vld [vmem:[#allocation4 + $0x168] sm:$0xff]
        %v707 = vld [vmem:[#allocation4 + $0x170] sm:$0xff]
        %v708 = vld [vmem:[#allocation4 + $0x178] sm:$0xff]
        %v709 = vld [vmem:[#allocation4 + $0x180] sm:$0xff]
        %v710 = vld [vmem:[#allocation4 + $0x188] sm:$0xff]
        %v711 = vld [vmem:[#allocation4 + $0x190] sm:$0xff]
        %v712 = vld [vmem:[#allocation4 + $0x198] sm:$0xff]
        %v713 = vld [vmem:[#allocation4 + $0x1a0] sm:$0xff]
        %v714 = vld [vmem:[#allocation4 + $0x1a8] sm:$0xff]
        %v715 = vld [vmem:[#allocation4 + $0x1b0] sm:$0xff]
        %v716 = vld [vmem:[#allocation4 + $0x1b8] sm:$0xff]
        %v717 = vld [vmem:[#allocation4 + $0x1c0] sm:$0xff]
        %v718 = vld [vmem:[#allocation4 + $0x1c8] sm:$0xff]
        %v719 = vld [vmem:[#allocation4 + $0x1d0] sm:$0xff]
        %v720 = vld [vmem:[#allocation4 + $0x1d8] sm:$0xff]
        %v721 = vld [vmem:[#allocation4 + $0x1e0] sm:$0xff]
        %v722 = vld [vmem:[#allocation4 + $0x1e8] sm:$0xff]
        %v723 = vld [vmem:[#allocation4 + $0x1f0] sm:$0xff]
        %v724 = vld [vmem:[#allocation4 + $0x1f8] sm:$0xff]
        %v725 = vld [vmem:[#allocation4 + $0x200] sm:$0xff]
        %v726 = vld [vmem:[#allocation4 + $0x208] sm:$0xff]
        %v727 = vld [vmem:[#allocation4 + $0x210] sm:$0xff]
        %v728 = vld [vmem:[#allocation4 + $0x218] sm:$0xff]
        %v729 = vld [vmem:[#allocation4 + $0x220] sm:$0xff]
        %v730 = vld [vmem:[#allocation4 + $0x228] sm:$0xff]
        %v731 = vld [vmem:[#allocation4 + $0x230] sm:$0xff]
        %v732 = vld [vmem:[#allocation4 + $0x238] sm:$0xff]
        %v733 = vld [vmem:[#allocation4 + $0x240] sm:$0xff]
        %v734 = vld [vmem:[#allocation4 + $0x248] sm:$0xff]
        %v735 = vld [vmem:[#allocation4 + $0x250] sm:$0xff]
        %v736 = vld [vmem:[#allocation4 + $0x258] sm:$0xff]
        %v737 = vld [vmem:[#allocation4 + $0x260] sm:$0xff]
        %v738 = vld [vmem:[#allocation4 + $0x268] sm:$0xff]
        %v739 = vld [vmem:[#allocation4 + $0x270] sm:$0xff]
        %v740 = vld [vmem:[#allocation4 + $0x278] sm:$0xff]
        %741 = vmatprep.subr.mxu0 0.0
        %742 = vmatpush1.msra.mxu0 %v676
        %743 = vmatprep.subr.mxu0 0.0
        %744 = vmatpush1.msra.mxu0 %v675
        %745 = vmatprep.subr.mxu0 0.0
        %746 = vmatpush1.msra.mxu0 %v674
        %747 = vmatprep.subr.mxu0 0.0
        %748 = vmatpush1.msra.mxu0 %v673
        %749 = vmatprep.subr.mxu0 0.0
        %750 = vmatpush1.msra.mxu0 %v672
        %751 = vmatprep.subr.mxu0 0.0
        %752 = vmatpush1.msra.mxu0 %v671
        %753 = vmatprep.subr.mxu0 0.0
        %754 = vmatpush1.msra.mxu0 %v670
        %755 = vmatprep.subr.mxu0 0.0
        %756 = vmatpush1.msra.mxu0 %v669
        %757 = vmatprep.subr.mxu0 0.0
        %758 = vmatpush1.msra.mxu0 %v668
        %759 = vmatprep.subr.mxu0 0.0
        %760 = vmatpush1.msra.mxu0 %v667
        %761 = vmatprep.subr.mxu0 0.0
        %762 = vmatpush1.msra.mxu0 %v666
        %763 = vmatprep.subr.mxu0 0.0
        %764 = vmatpush1.msra.mxu0 %v665
        %765 = vmatprep.subr.mxu0 0.0
        %766 = vmatpush1.msra.mxu0 %v664
        %767 = vmatprep.subr.mxu0 0.0
        %768 = vmatpush1.msra.mxu0 %v663
        %769 = vmatprep.subr.mxu0 0.0
        %770 = vmatpush1.msra.mxu0 %v662
        %771 = vmatprep.subr.mxu0 0.0
        %772 = vmatpush1.msra.mxu0 %v661
        %773 = vmatprep.subr.mxu0 0.0
        %774 = vmatpush2.msra.mxu0 %v692
        %775 = vmatprep.subr.mxu0 0.0
        %776 = vmatpush2.msra.mxu0 %v691
        %777 = vmatprep.subr.mxu0 0.0
        %778 = vmatpush2.msra.mxu0 %v690
        %779 = vmatprep.subr.mxu0 0.0
        %780 = vmatpush2.msra.mxu0 %v689
        %781 = vmatprep.subr.mxu0 0.0
        %782 = vmatpush2.msra.mxu0 %v688
        %783 = vmatprep.subr.mxu0 0.0
        %784 = vmatpush2.msra.mxu0 %v687
        %785 = vmatprep.subr.mxu0 0.0
        %786 = vmatpush2.msra.mxu0 %v686
        %787 = vmatprep.subr.mxu0 0.0
        %788 = vmatpush2.msra.mxu0 %v685
        %789 = vmatprep.subr.mxu0 0.0
        %790 = vmatpush2.msra.mxu0 %v684
        %791 = vmatprep.subr.mxu0 0.0
        %792 = vmatpush2.msra.mxu0 %v683
        %793 = vmatprep.subr.mxu0 0.0
        %794 = vmatpush2.msra.mxu0 %v682
        %795 = vmatprep.subr.mxu0 0.0
        %796 = vmatpush2.msra.mxu0 %v681
        %797 = vmatprep.subr.mxu0 0.0
        %798 = vmatpush2.msra.mxu0 %v680
        %799 = vmatprep.subr.mxu0 0.0
        %800 = vmatpush2.msra.mxu0 %v679
        %801 = vmatprep.subr.mxu0 0.0
        %802 = vmatpush2.msra.mxu0 %v678
        %803 = vmatprep.subr.mxu0 0.0
        %804 = vmatpush2.msra.mxu0 %v677
        %805 = vmatprep.mubr.f32.mxu0 %v641
        %806 = vmatmul.mubr.f32.gmra.mxu0 %v635
        %v807 = vpop.f32.mrf.mxu0
        %v808 = vadd.f32 0.0, %v807
        %v809 = vpop.f32.mrf.mxu0
        %810 = vmatprep.mubr.f32.mxu0 %v640
        %811 = vmatmul.mubr.f32.gmra.mxu0 %v636
        %v812 = vpop.f32.mrf.mxu0
        %v813 = vadd.f32 0.0, %v812
        %v814 = vpop.f32.mrf.mxu0
        %815 = vdwg.mxu0
        %816 = vmatprep.subr.mxu0 0.0
        %817 = vmatpush1.msra.mxu0 %v708
        %818 = vmatprep.subr.mxu0 0.0
        %819 = vmatpush1.msra.mxu0 %v707
        %820 = vmatprep.subr.mxu0 0.0
        %821 = vmatpush1.msra.mxu0 %v706
        %822 = vmatprep.subr.mxu0 0.0
        %823 = vmatpush1.msra.mxu0 %v705
        %824 = vmatprep.subr.mxu0 0.0
        %825 = vmatpush1.msra.mxu0 %v704
        %826 = vmatprep.subr.mxu0 0.0
        %827 = vmatpush1.msra.mxu0 %v703
        %828 = vmatprep.subr.mxu0 0.0
        %829 = vmatpush1.msra.mxu0 %v702
        %830 = vmatprep.subr.mxu0 0.0
        %831 = vmatpush1.msra.mxu0 %v701
        %832 = vmatprep.subr.mxu0 0.0
        %833 = vmatpush1.msra.mxu0 %v700
        %834 = vmatprep.subr.mxu0 0.0
        %835 = vmatpush1.msra.mxu0 %v699
        %836 = vmatprep.subr.mxu0 0.0
        %837 = vmatpush1.msra.mxu0 %v698
        %838 = vmatprep.subr.mxu0 0.0
        %839 = vmatpush1.msra.mxu0 %v697
        %840 = vmatprep.subr.mxu0 0.0
        %841 = vmatpush1.msra.mxu0 %v696
        %842 = vmatprep.subr.mxu0 0.0
        %843 = vmatpush1.msra.mxu0 %v695
        %844 = vmatprep.subr.mxu0 0.0
        %845 = vmatpush1.msra.mxu0 %v694
        %846 = vmatprep.subr.mxu0 0.0
        %847 = vmatpush1.msra.mxu0 %v693
        %848 = vmatprep.subr.mxu0 0.0
        %849 = vmatpush2.msra.mxu0 %v724
        %850 = vmatprep.subr.mxu0 0.0
        %851 = vmatpush2.msra.mxu0 %v723
        %852 = vmatprep.subr.mxu0 0.0
        %853 = vmatpush2.msra.mxu0 %v722
        %854 = vmatprep.subr.mxu0 0.0
        %855 = vmatpush2.msra.mxu0 %v721
        %856 = vmatprep.subr.mxu0 0.0
        %857 = vmatpush2.msra.mxu0 %v720
        %858 = vmatprep.subr.mxu0 0.0
        %859 = vmatpush2.msra.mxu0 %v719
        %860 = vmatprep.subr.mxu0 0.0
        %861 = vmatpush2.msra.mxu0 %v718
        %862 = vmatprep.subr.mxu0 0.0
        %863 = vmatpush2.msra.mxu0 %v717
        %864 = vmatprep.subr.mxu0 0.0
        %865 = vmatpush2.msra.mxu0 %v716
        %866 = vmatprep.subr.mxu0 0.0
        %867 = vmatpush2.msra.mxu0 %v715
        %868 = vmatprep.subr.mxu0 0.0
        %869 = vmatpush2.msra.mxu0 %v714
        %870 = vmatprep.subr.mxu0 0.0
        %871 = vmatpush2.msra.mxu0 %v713
        %872 = vmatprep.subr.mxu0 0.0
        %873 = vmatpush2.msra.mxu0 %v712
        %874 = vmatprep.subr.mxu0 0.0
        %875 = vmatpush2.msra.mxu0 %v711
        %876 = vmatprep.subr.mxu0 0.0
        %877 = vmatpush2.msra.mxu0 %v710
        %878 = vmatprep.subr.mxu0 0.0
        %879 = vmatpush2.msra.mxu0 %v709
        %880 = vmatprep.mubr.f32.mxu0 %v652
        %881 = vmatmul.mubr.f32.gmra.mxu0 %v646
        %v882 = vpop.f32.mrf.mxu0
        %v883 = vadd.f32 %v808, %v882
        %v884 = vpop.f32.mrf.mxu0
        %885 = vmatprep.mubr.f32.mxu0 %v651
        %886 = vmatmul.mubr.f32.gmra.mxu0 %v645
        %v887 = vpop.f32.mrf.mxu0
        %v888 = vadd.f32 %v813, %v887
        %v889 = vpop.f32.mrf.mxu0
        %890 = vdwg.mxu0
        %891 = vmatprep.subr.mxu0 0.0
        %892 = vmatpush1.msra.mxu0 %v740
        %893 = vmatprep.subr.mxu0 0.0
        %894 = vmatpush1.msra.mxu0 %v739
        %895 = vmatprep.subr.mxu0 0.0
        %896 = vmatpush1.msra.mxu0 %v738
        %897 = vmatprep.subr.mxu0 0.0
        %898 = vmatpush1.msra.mxu0 %v737
        %899 = vmatprep.subr.mxu0 0.0
        %900 = vmatpush1.msra.mxu0 %v736
        %901 = vmatprep.subr.mxu0 0.0
        %902 = vmatpush1.msra.mxu0 %v735
        %903 = vmatprep.subr.mxu0 0.0
        %904 = vmatpush1.msra.mxu0 %v734
        %905 = vmatprep.subr.mxu0 0.0
        %906 = vmatpush1.msra.mxu0 %v733
        %907 = vmatprep.subr.mxu0 0.0
        %908 = vmatpush1.msra.mxu0 %v732
        %909 = vmatprep.subr.mxu0 0.0
        %910 = vmatpush1.msra.mxu0 %v731
        %911 = vmatprep.subr.mxu0 0.0
        %912 = vmatpush1.msra.mxu0 %v730
        %913 = vmatprep.subr.mxu0 0.0
        %914 = vmatpush1.msra.mxu0 %v729
        %915 = vmatprep.subr.mxu0 0.0
        %916 = vmatpush1.msra.mxu0 %v728
        %917 = vmatprep.subr.mxu0 0.0
        %918 = vmatpush1.msra.mxu0 %v727
        %919 = vmatprep.subr.mxu0 0.0
        %920 = vmatpush1.msra.mxu0 %v726
        %921 = vmatprep.subr.mxu0 0.0
        %922 = vmatpush1.msra.mxu0 %v725
        %923 = vmatprep.subr.mxu0 0.0
        %924 = vmatpush2.msra.mxu0 0.0
        %925 = vmatprep.subr.mxu0 0.0
        %926 = vmatpush2.msra.mxu0 0.0
        %927 = vmatprep.subr.mxu0 0.0
        %928 = vmatpush2.msra.mxu0 0.0
        %929 = vmatprep.subr.mxu0 0.0
        %930 = vmatpush2.msra.mxu0 0.0
        %931 = vmatprep.subr.mxu0 0.0
        %932 = vmatpush2.msra.mxu0 0.0
        %933 = vmatprep.subr.mxu0 0.0
        %934 = vmatpush2.msra.mxu0 0.0
        %935 = vmatprep.subr.mxu0 0.0
        %936 = vmatpush2.msra.mxu0 0.0
        %937 = vmatprep.subr.mxu0 0.0
        %938 = vmatpush2.msra.mxu0 0.0
        %939 = vmatprep.subr.mxu0 0.0
        %940 = vmatpush2.msra.mxu0 0.0
        %941 = vmatprep.subr.mxu0 0.0
        %942 = vmatpush2.msra.mxu0 0.0
        %943 = vmatprep.subr.mxu0 0.0
        %944 = vmatpush2.msra.mxu0 0.0
        %945 = vmatprep.subr.mxu0 0.0
        %946 = vmatpush2.msra.mxu0 0.0
        %947 = vmatprep.subr.mxu0 0.0
        %948 = vmatpush2.msra.mxu0 0.0
        %949 = vmatprep.subr.mxu0 0.0
        %950 = vmatpush2.msra.mxu0 0.0
        %951 = vmatprep.subr.mxu0 0.0
        %952 = vmatpush2.msra.mxu0 0.0
        %953 = vmatprep.subr.mxu0 0.0
        %954 = vmatpush2.msra.mxu0 0.0
        %955 = vmatprep.mubr.f32.mxu0 0.0
        %956 = vmatmul.mubr.f32.gmra.mxu0 %v658
        %v957 = vpop.f32.mrf.mxu0
        %v958 = vadd.f32 %v883, %v957
        %v959 = vpop.f32.mrf.mxu0
        %960 = vmatprep.mubr.f32.mxu0 0.0
        %961 = vmatmul.mubr.f32.gmra.mxu0 %v657
        %v962 = vpop.f32.mrf.mxu0
        %v963 = vadd.f32 %v888, %v962
        %v964 = vpop.f32.mrf.mxu0
        %965 = vdwg.mxu0
        %v966 = vld [vmem:[%s8] sm:$0x1]
        %v968 = vlaneseq
        %v969 = vshrl.u32 %v968, 7
        %v970 = vsub.s32 0, %v969
        %v971 = vrot.slane %v966, %v970
        %v973 = vmul.f32 %v958, %v971
        %v974 = vmul.f32 %v963, %v971
        %v975 = vld [vmem:[%s9] sm:$0x1]
        %v977 = vlaneseq
        %v978 = vshrl.u32 %v977, 7
        %v979 = vsub.s32 0, %v978
        %v980 = vrot.slane %v975, %v979
        %v982 = vadd.f32 %v973, %v980
        %v983 = vadd.f32 %v974, %v980
        %v984 = vmax.f32 %v982, 0.0
        %v985 = vmax.f32 %v983, 0.0
        %986 = vst [vmem:[%s389] sm:$0xff] %v984
        %987 = vst [vmem:[%s389 + $0x8] sm:$0x3] %v985
        %p988 = scmp.lt.s32.totalorder %s23, 1
        %s989 = scalar_select %p988, %s23, 1
        %s990 = smul.addr %s989, 2
        %s991 = smul.addr %s990, 8
        %s992 = scalar_lea.vmem %s10, %s991
        // Predicated region
        $region69: #{tpu_custom_call.1} parent=59 // pred_check
          %p993 = pneg %p256
        $region70: #{tpu_custom_call.1} parent=59 // pred_check_branch
          %995 = sbr.rel (%p993) target = $region72
        $region71: #{tpu_custom_call.1} parent=59 // pred_region
          _
        $region72: #{tpu_custom_call.1} parent=59 // pred_fallthru
          _
      $region60: #{tpu_custom_call.1} parent=5 // pred_fallthru
        _
      %p996 = scmp.le.s32.totalorder 2, %s18
      // Predicated region
      $region73: #{tpu_custom_call.1} parent=5 // pred_check
        %p997 = pneg %p996
      $region74: #{tpu_custom_call.1} parent=5 // pred_check_branch
        %999 = sbr.rel (%p997) target = $region76
      $region75: #{tpu_custom_call.1} parent=5 // pred_region
        %s1000 = ssub.s32 %s18, 2
        // Predicated region
        $region77: #{tpu_custom_call.1} parent=75 // pred_check
          %p1001 = pneg %p262
        $region78: #{tpu_custom_call.1} parent=75 // pred_check_branch
          %1003 = sbr.rel (%p1001) target = $region80
        $region79: #{tpu_custom_call.1} parent=75 // pred_region
          %p1004 = scmp.lt.s32.totalorder %s24, 1
          %s1005 = scalar_select %p1004, %s24, 1
          %s1006 = smul.addr %s1005, 2
          %s1007 = smul.addr %s1006, 8
          %s1008 = scalar_lea.vmem %s10, %s1007
        $region80: #{tpu_custom_call.1} parent=75 // pred_fallthru
          _
      $region76: #{tpu_custom_call.1} parent=5 // pred_fallthru
        _
    $region6: #{tpu_custom_call.1} parent=1 // loop_footer
      %s22 = sadd.s32 1, %s18
    $region7: #{tpu_custom_call.1} parent=1 // loop_footer_branch
      %17 = sbr.rel target = $region3
    $region8: #{tpu_custom_call.1} parent=1 // loop_exit
      _
    %1009 = vsyncpa [#allocation3], 1
    %s1010 = scalar_lea.sflag [#allocation3], 1
    %1011 = vsyncpa %s1010, 1
    %1012 = vsyncpa [#allocation5], 1

</llo_original>
